<compile_context>
chip_gen: v6e
topology: v6e:2x2x1
jax: 0.10.0
libtpu: 0.0.40
codegen_flags: <defaults>
</compile_context>

<pallas_src>
import functools

import jax
import jax.numpy as jnp
from jax.experimental import pallas as pl
from jax.experimental.pallas import tpu as pltpu

_LANE = 128
_SUBLANE = 8


def _round_up(x, m):
    return ((x + m - 1) // m) * m


def _vmem_capacity_bytes():
    try:
        cap = int(getattr(pltpu.get_tpu_info(), "vmem_capacity_bytes", 0))
        if cap > 0:
            return cap
    except Exception:
        pass
    return 64 * 2**20  # conservative fallback (v7x per-TensorCore VMEM)


def _nn_autoencoder_kernel(x_ref, w1t_ref, b1_ref, w2t_ref, b2_ref,
                           o_ref, acc_ref, *, mm_dtype):
    """One (batch tile, hidden tile) step of the fused forward."""
    kh = pl.program_id(1)

    @pl.when(kh == 0)
    def _init():
        acc_ref[...] = jnp.zeros_like(acc_ref)

    # Single load of the x tile; both the f32 copy (final elementwise multiply)
    # and the MXU operand are derived from it.
    x_f32 = x_ref[...].astype(jnp.float32)
    x_mm = x_f32.astype(mm_dtype)

    h = jnp.dot(x_mm, w1t_ref[...],
                preferred_element_type=jnp.float32) + b1_ref[...]
    h = jnp.where(h >= 0, h, jnp.float32(0.01) * h)          # LeakyReLU(0.01)
    acc_ref[...] += jnp.dot(h.astype(mm_dtype), w2t_ref[...],
                            preferred_element_type=jnp.float32)

    @pl.when(kh == pl.num_programs(1) - 1)
    def _finalize():
        o_ref[...] = ((acc_ref[...] + b2_ref[...]) * x_f32).astype(o_ref.dtype)


def prepare_params(w1, b1, w2, b2, *, matmul_dtype=jnp.bfloat16,
                   vmem_budget_bytes=None):
    """One-time weight prep: transpose, cast to matmul dtype, pick the hidden
    tile, and zero-pad the hidden axis to a tile multiple (padded hidden lanes
    contribute exactly zero to the output). Call once at model init."""
    hidden_1, num_input = w1.shape
    num_output, h1_w = w2.shape
    assert h1_w == hidden_1
    assert b1.shape == (hidden_1,) and b2.shape == (num_output,)
    assert num_output == num_input, "autoencoder: myLinear output must match x"

    if vmem_budget_bytes is None:
        vmem_budget_bytes = int(_vmem_capacity_bytes() * 0.75)
    mm_bytes = jnp.dtype(matmul_dtype).itemsize

    def weight_bytes(th):
        # BlockSpec inputs are double-buffered -> count resident blocks 2x.
        return (2 * (num_input * th + th * num_output) * mm_bytes
                + 2 * (th + num_output) * 4)

    # Keep the resident weight blocks inside ~60% of the budget so the
    # streamed batch tile still gets a useful share.
    weight_budget = int(vmem_budget_bytes * 0.6)
    if weight_bytes(hidden_1) <= weight_budget:
        th = hidden_1                       # whole hidden dim resident, n_h = 1
        h_pad = hidden_1
    else:
        th = weight_budget // (2 * (num_input + num_output) * mm_bytes)
        th = max(_LANE, (th // _LANE) * _LANE)
        h_pad = _round_up(hidden_1, th)

    f32 = jnp.float32
    if h_pad == hidden_1:
        w1t = w1.T.astype(matmul_dtype)                       # (ni, h)
        w2t = w2.T.astype(matmul_dtype)                       # (h, no)
        b1r = b1.astype(f32).reshape(1, hidden_1)
    else:
        w1t = jnp.zeros((num_input, h_pad), matmul_dtype).at[:, :hidden_1].set(
            w1.T.astype(matmul_dtype))
        w2t = jnp.zeros((h_pad, num_output), matmul_dtype).at[:hidden_1, :].set(
            w2.T.astype(matmul_dtype))
        b1r = jnp.zeros((1, h_pad), f32).at[0, :hidden_1].set(b1.astype(f32))
    b2r = b2.astype(f32).reshape(1, num_output)

    return dict(w1t=w1t, b1=b1r, w2t=w2t, b2=b2r,
                num_input=num_input, hidden_1=hidden_1, num_output=num_output,
                h_pad=h_pad, th=th, matmul_dtype=matmul_dtype,
                weight_bytes=weight_bytes(th))


def neural_network_forward(x, params, *, block_b=512):
    """x: (B, num_input) -> (B, num_output). `params` from prepare_params."""
    B, ni = x.shape
    assert ni == params["num_input"]
    no = params["num_output"]
    th = params["th"]
    h_pad = params["h_pad"]
    mm_dtype = params["matmul_dtype"]
    x_bytes = jnp.dtype(x.dtype).itemsize

    cap = _vmem_capacity_bytes()
    budget = int(cap * 0.75)
    weight_bytes = params["weight_bytes"]
    # Per-row footprint: double-buffered x/out blocks, f32 accumulator scratch,
    # plus f32 temporaries for x, h and y.
    per_row = 2 * ni * x_bytes + 2 * no * x_bytes + (no + ni + th + no) * 4

    rows_fit = max(_SUBLANE, (budget - weight_bytes) // per_row)
    tb = min(int(block_b), B, int(rows_fit))
    if tb < B:
        tb = max(_SUBLANE, (tb // _SUBLANE) * _SUBLANE)   # multiple of 8 sublanes
    if tb >= B and B >= 2 * _SUBLANE:
        # Keep >=2 batch blocks so v7x megacore can shard the "parallel" axis;
        # one extra grid step (~0.35us) is negligible on 1-TC parts.
        tb = min(tb, _round_up(-(-B // 2), _SUBLANE))
    tb = min(tb, B) if tb >= B else tb

    n_b = pl.cdiv(B, tb)          # ragged last block is safe: rows independent
    n_h = h_pad // th

    est = weight_bytes + per_row * tb + (1 << 20)
    vmem_limit = int(min(max(2 * est, 32 * 2**20), int(cap * 0.9)))

    vmem = pltpu.MemorySpace.VMEM
    out = pl.pallas_call(
        functools.partial(_nn_autoencoder_kernel, mm_dtype=mm_dtype),
        out_shape=jax.ShapeDtypeStruct((B, no), x.dtype),
        grid=(n_b, n_h),
        in_specs=[
            pl.BlockSpec((tb, ni), lambda i, k: (i, 0), memory_space=vmem),   # x tile
            pl.BlockSpec((ni, th), lambda i, k: (0, k), memory_space=vmem),   # W1^T chunk
            pl.BlockSpec((1, th), lambda i, k: (0, k), memory_space=vmem),    # b1 chunk
            pl.BlockSpec((th, no), lambda i, k: (k, 0), memory_space=vmem),   # W2^T chunk
            pl.BlockSpec((1, no), lambda i, k: (0, 0), memory_space=vmem),    # b2 (resident)
        ],
        out_specs=pl.BlockSpec((tb, no), lambda i, k: (i, 0), memory_space=vmem),
        scratch_shapes=[pltpu.VMEM((tb, no), jnp.float32)],                    # f32 acc
        compiler_params=pltpu.CompilerParams(
            dimension_semantics=("parallel", "arbitrary"),
            vmem_limit_bytes=vmem_limit,
        ),
    )(x, params["w1t"], params["b1"], params["w2t"], params["b2"])
    return out


def _torch_like_linear_init(key, out_features, in_features, dtype=jnp.float32):
    """Deterministic init mimicking nn.Linear's uniform(-1/sqrt(fan_in), +)."""
    kw, kb = jax.random.split(key)
    bound = 1.0 / (in_features ** 0.5)
    w = jax.random.uniform(kw, (out_features, in_features), dtype, -bound, bound)
    b = jax.random.uniform(kb, (out_features,), dtype, -bound, bound)
    return w, b


if __name__ == "__main__":
    # Small autoencoder shapes (num_input == num_output, required by the *x).
    B, num_input, hidden_1 = 8, 16, 32
    num_output = num_input

    key = jax.random.PRNGKey(0)
    kx, k1, k2 = jax.random.split(key, 3)

    x = jax.random.normal(kx, (B, num_input), jnp.float32)
    w1, b1 = _torch_like_linear_init(k1, hidden_1, num_input)
    w2, b2 = _torch_like_linear_init(k2, num_output, hidden_1)

    params = prepare_params(w1, b1, w2, b2)          # one-time weight prep
    out = neural_network_forward(x, params)
    out = jax.block_until_ready(out)

    # Pure-JAX reference at identical matmul precision (bf16 operands, f32 acc).
    mm = jnp.bfloat16
    h_ref = jnp.dot(x.astype(mm), w1.T.astype(mm),
                    preferred_element_type=jnp.float32) + b1
    h_ref = jnp.where(h_ref >= 0, h_ref, 0.01 * h_ref)
    y_ref = jnp.dot(h_ref.astype(mm), w2.T.astype(mm),
                    preferred_element_type=jnp.float32) + b2
    ref = y_ref * x

    assert out.shape == (B, num_output)
    assert jnp.allclose(out, ref, atol=2e-3, rtol=2e-3), "mismatch vs reference"
    print("KERNEL_OK")
</pallas_src>

<mosaic_0001>
module attributes {stable_mosaic.version = 11 : i64} {
  func.func @_nn_autoencoder_kernel(%arg0: i32, %arg1: i32, %arg2: memref<8x16xf32, #tpu.memory_space<vmem>>, %arg3: memref<16x32xbf16, #tpu.memory_space<vmem>>, %arg4: memref<1x32xf32, #tpu.memory_space<vmem>>, %arg5: memref<32x16xbf16, #tpu.memory_space<vmem>>, %arg6: memref<1x16xf32, #tpu.memory_space<vmem>>, %arg7: memref<8x16xf32, #tpu.memory_space<vmem>>, %arg8: memref<8x16xf32, #tpu.memory_space<vmem>>) attributes {dimension_semantics = [#tpu.dimension_semantics<parallel>, #tpu.dimension_semantics<arbitrary>], iteration_bounds = array<i64: 1, 1>, scalar_prefetch = 0 : i64, scratch_operands = 1 : i64, tpu.core_type = #tpu.core_type<tc>, window_params = [{transform_indices = @transform_0, window_bounds = array<i64: 8, 16>}, {transform_indices = @transform_1, window_bounds = array<i64: 16, 32>}, {transform_indices = @transform_2, window_bounds = array<i64: 1, 32>}, {transform_indices = @transform_3, window_bounds = array<i64: 32, 16>}, {pipeline_mode = #tpu.pipeline_mode<synchronous>, transform_indices = @transform_4, window_bounds = array<i64: 1, 16>}, {transform_indices = @transform_5, window_bounds = array<i64: 8, 16>}]} {
    %c0_i32 = arith.constant 0 : i32
    %0 = arith.cmpi eq, %arg1, %c0_i32 : i32
    %1 = arith.extui %0 : i1 to i32
    %c0_i32_0 = arith.constant 0 : i32
    %2 = arith.cmpi ne, %1, %c0_i32_0 : i32
    scf.if %2 {
      %cst_17 = arith.constant 0.000000e+00 : f32
      %24 = vector.broadcast %cst_17 : f32 to vector<8x16xf32>
      %c0_18 = arith.constant 0 : index
      %c0_19 = arith.constant 0 : index
      %25 = vector.load %arg8[%c0_18, %c0_19] : memref<8x16xf32, #tpu.memory_space<vmem>>, vector<8x16xf32>
      tpu.vector_store %arg8[%c0_18, %c0_19], %24 {strides = array<i32>} : memref<8x16xf32, #tpu.memory_space<vmem>>, vector<8x16xf32>,
    } else {
    }
    %c0 = arith.constant 0 : index
    %c0_1 = arith.constant 0 : index
    %3 = vector.load %arg2[%c0, %c0_1] : memref<8x16xf32, #tpu.memory_space<vmem>>, vector<8x16xf32>
    %4 = arith.truncf %3 : vector<8x16xf32> to vector<8x16xbf16>
    %c0_2 = arith.constant 0 : index
    %c0_3 = arith.constant 0 : index
    %5 = vector.load %arg3[%c0_2, %c0_3] : memref<16x32xbf16, #tpu.memory_space<vmem>>, vector<16x32xbf16>
    %cst = arith.constant dense<0.000000e+00> : vector<8x32xf32>
    %6 = tpu.matmul %4, %5, %cst {dimension_numbers = #tpu.dot_dimension_numbers<[1], [0], [0], [1], [0, 0, 1, 1], [], []>} : vector<8x16xbf16>, vector<16x32xbf16>, vector<8x32xf32> -> vector<8x32xf32>
    %c0_4 = arith.constant 0 : index
    %c0_5 = arith.constant 0 : index
    %7 = vector.load %arg4[%c0_4, %c0_5] : memref<1x32xf32, #tpu.memory_space<vmem>>, vector<1x32xf32>
    %8 = vector.broadcast %7 : vector<1x32xf32> to vector<8x32xf32>
    %9 = arith.addf %6, %8 : vector<8x32xf32>
    %cst_6 = arith.constant 0.000000e+00 : f32
    %10 = vector.broadcast %cst_6 : f32 to vector<8x32xf32>
    %11 = arith.cmpf oge, %9, %10 : vector<8x32xf32>
    %cst_7 = arith.constant 0.00999999977 : f32
    %12 = vector.broadcast %cst_7 : f32 to vector<8x32xf32>
    %13 = arith.mulf %12, %9 : vector<8x32xf32>
    %14 = arith.select %11, %9, %13 : vector<8x32xi1>, vector<8x32xf32>
    %c0_8 = arith.constant 0 : index
    %c0_9 = arith.constant 0 : index
    %15 = vector.load %arg8[%c0_8, %c0_9] : memref<8x16xf32, #tpu.memory_space<vmem>>, vector<8x16xf32>
    %16 = arith.truncf %14 : vector<8x32xf32> to vector<8x32xbf16>
    %c0_10 = arith.constant 0 : index
    %c0_11 = arith.constant 0 : index
    %17 = vector.load %arg5[%c0_10, %c0_11] : memref<32x16xbf16, #tpu.memory_space<vmem>>, vector<32x16xbf16>
    %cst_12 = arith.constant dense<0.000000e+00> : vector<8x16xf32>
    %18 = tpu.matmul %16, %17, %cst_12 {dimension_numbers = #tpu.dot_dimension_numbers<[1], [0], [0], [1], [0, 0, 1, 1], [], []>} : vector<8x32xbf16>, vector<32x16xbf16>, vector<8x16xf32> -> vector<8x16xf32>
    %19 = arith.addf %15, %18 : vector<8x16xf32>
    %c0_13 = arith.constant 0 : index
    %c0_14 = arith.constant 0 : index
    %20 = vector.load %arg8[%c0_13, %c0_14] : memref<8x16xf32, #tpu.memory_space<vmem>>, vector<8x16xf32>
    tpu.vector_store %arg8[%c0_13, %c0_14], %19 {strides = array<i32>} : memref<8x16xf32, #tpu.memory_space<vmem>>, vector<8x16xf32>,
    %c0_i32_15 = arith.constant 0 : i32
    %21 = arith.cmpi eq, %arg1, %c0_i32_15 : i32
    %22 = arith.extui %21 : i1 to i32
    %c0_i32_16 = arith.constant 0 : i32
    %23 = arith.cmpi ne, %22, %c0_i32_16 : i32
    scf.if %23 {
      %c0_17 = arith.constant 0 : index
      %c0_18 = arith.constant 0 : index
      %24 = vector.load %arg8[%c0_17, %c0_18] : memref<8x16xf32, #tpu.memory_space<vmem>>, vector<8x16xf32>
      %c0_19 = arith.constant 0 : index
      %c0_20 = arith.constant 0 : index
      %25 = vector.load %arg6[%c0_19, %c0_20] : memref<1x16xf32, #tpu.memory_space<vmem>>, vector<1x16xf32>
      %26 = vector.broadcast %25 : vector<1x16xf32> to vector<8x16xf32>
      %27 = arith.addf %24, %26 : vector<8x16xf32>
      %28 = arith.mulf %27, %3 : vector<8x16xf32>
      %c0_21 = arith.constant 0 : index
      %c0_22 = arith.constant 0 : index
      %29 = vector.load %arg7[%c0_21, %c0_22] : memref<8x16xf32, #tpu.memory_space<vmem>>, vector<8x16xf32>
      tpu.vector_store %arg7[%c0_21, %c0_22], %28 {strides = array<i32>} : memref<8x16xf32, #tpu.memory_space<vmem>>, vector<8x16xf32>,
    } else {
    }
    return
  }
  func.func @transform_0(%arg0: i32, %arg1: i32) -> (i32, i32) {
    %c0_i32 = arith.constant 0 : i32
    %c0_i32_0 = arith.constant 0 : i32
    return %arg0, %c0_i32 : i32, i32
  }
  func.func @transform_1(%arg0: i32, %arg1: i32) -> (i32, i32) {
    %c0_i32 = arith.constant 0 : i32
    %c0_i32_0 = arith.constant 0 : i32
    return %c0_i32, %arg1 : i32, i32
  }
  func.func @transform_2(%arg0: i32, %arg1: i32) -> (i32, i32) {
    %c0_i32 = arith.constant 0 : i32
    %c0_i32_0 = arith.constant 0 : i32
    return %c0_i32, %arg1 : i32, i32
  }
  func.func @transform_3(%arg0: i32, %arg1: i32) -> (i32, i32) {
    %c0_i32 = arith.constant 0 : i32
    %c0_i32_0 = arith.constant 0 : i32
    return %arg1, %c0_i32 : i32, i32
  }
  func.func @transform_4(%arg0: i32, %arg1: i32) -> (i32, i32) {
    %c0_i32 = arith.constant 0 : i32
    %c0_i32_0 = arith.constant 0 : i32
    %c0_i32_1 = arith.constant 0 : i32
    return %c0_i32, %c0_i32_0 : i32, i32
  }
  func.func @transform_5(%arg0: i32, %arg1: i32) -> (i32, i32) {
    %c0_i32 = arith.constant 0 : i32
    %c0_i32_0 = arith.constant 0 : i32
    return %arg0, %c0_i32 : i32, i32
  }
}

</mosaic_0001>

<llo_original>
// kernel: tpu_custom_call.1
$region0: #{tpu_custom_call.1}
  #allocation0 [shape = 'u32[]', space=smem, size = 0x4, offset = 0x4, fixed_abs, tag = 'smem constant byte address 0x4 - core index']
  #allocation1 [shape = 'u32[144,128]{1,0:T(1,128)}', space=vmem, size = 0x12000, scoped, tag = 'internal scratch']
  #allocation2 [shape = 'f32[8,16]{1,0:T(8,128)}', space=vmem, size = 0x1000, scoped, tag = 'scratch operand']
  %s0 = inlined_call_operand.vmem [shape: f32[8,16], index: 0, kind: input, shape index: {}]
  %s1 = inlined_call_operand.vmem [shape: bf16[16,32], index: 1, kind: input, shape index: {}]
  %s2 = inlined_call_operand.vmem [shape: f32[1,32], index: 2, kind: input, shape index: {}]
  %s3 = inlined_call_operand.vmem [shape: bf16[32,16], index: 3, kind: input, shape index: {}]
  %s4 = inlined_call_operand.vmem [shape: f32[1,16], index: 4, kind: input, shape index: {}]
  %s5 = inlined_call_operand.hbm [shape: f32[8,16], index: 5, kind: output, shape index: {}]
  %s6 = sld [smem:[#allocation0]]
  $region38: #{tpu_custom_call.1} parent=0
    _
  %s8 = ssub.s32 1, %s6
  %s9 = scalar_select 0, %s8, %s6
  $region1: #{tpu_custom_call.1} parent=0
    #allocation3 [shape = 'u8[4096]{0}', space=vmem, size = 0x1000, scoped, tag = 'output window, operand 0, single buffered']
    #allocation4 [shape = 's32[1]{0}', space=sflag, size = 0x4, scoped, tag = 'scoped memory for tpu_custom_call.1']
    %10 = vsyncpa [#allocation4], 0
    // Predicated region
    $region2: #{tpu_custom_call.1} parent=1 // pred_check
      _
    $region3: #{tpu_custom_call.1} parent=1 // pred_check_branch
      %12 = sbr.rel (0) target = $region5
    $region4: #{tpu_custom_call.1} parent=1 // pred_region
      _
    $region5: #{tpu_custom_call.1} parent=1 // pred_fallthru
      _
    // Predicated region
    $region6: #{tpu_custom_call.1} parent=1 // pred_check
      _
    $region7: #{tpu_custom_call.1} parent=1 // pred_check_branch
      %14 = sbr.rel (0) target = $region9
    $region8: #{tpu_custom_call.1} parent=1 // pred_region
      _
    $region9: #{tpu_custom_call.1} parent=1 // pred_fallthru
      _
    // Predicated region
    $region10: #{tpu_custom_call.1} parent=1 // pred_check
      _
    $region11: #{tpu_custom_call.1} parent=1 // pred_check_branch
      %16 = sbr.rel (0) target = $region13
    $region12: #{tpu_custom_call.1} parent=1 // pred_region
      _
    $region13: #{tpu_custom_call.1} parent=1 // pred_fallthru
      _
    // Predicated region
    $region14: #{tpu_custom_call.1} parent=1 // pred_check
      _
    $region15: #{tpu_custom_call.1} parent=1 // pred_check_branch
      %18 = sbr.rel (0) target = $region17
    $region16: #{tpu_custom_call.1} parent=1 // pred_region
      _
    $region17: #{tpu_custom_call.1} parent=1 // pred_fallthru
      _
    // Predicated region
    $region18: #{tpu_custom_call.1} parent=1 // pred_check
      _
    $region19: #{tpu_custom_call.1} parent=1 // pred_check_branch
      %20 = sbr.rel (0) target = $region21
    $region20: #{tpu_custom_call.1} parent=1 // pred_region
      _
    $region21: #{tpu_custom_call.1} parent=1 // pred_fallthru
      _
    %p22 = scmp.eq.s32.totalorder 0, 0
    // Predicated region
    $region22: #{tpu_custom_call.1} parent=1 // pred_check
      %p23 = pneg %p22
    $region23: #{tpu_custom_call.1} parent=1 // pred_check_branch
      %25 = sbr.rel (%p23) target = $region25
    $region24: #{tpu_custom_call.1} parent=1 // pred_region
      %vm26 = vcmask 130048
      %27 = vst.msk [vmem:[#allocation2] sm:$0xff] %vm26, 0.0
    $region25: #{tpu_custom_call.1} parent=1 // pred_fallthru
      _
    %v28 = vld [vmem:[%s0] sm:$0xff]
    %v29 = vpack.c.bf16 %v28, %v28
    %v30 = vld [vmem:[%s1] sm:$0xf]
    %v31 = vld [vmem:[%s1 + $0x4] sm:$0xf]
    %v32 = vld [vmem:[%s2] sm:$0x1]
    %v34 = vlaneseq
    %v35 = vshrl.u32 %v34, 7
    %v36 = vsub.s32 0, %v35
    %v37 = vrot.slane %v32, %v36
    %v41 = vunpack.c.l.b16 %v30
    %v42 = vunpack.c.l.b16 %v31
    %v43 = vpack.c.b16 %v42, %v41
    %vm45 = vcmask 130048
    %v47 = vsel %vm45, %v29, 0
    %49 = vmatprep.subr.bf16.mxu0 0
    %50 = vmatpush1.bf16.msra.mxu0 0
    %51 = vmatprep.subr.bf16.mxu0 0
    %52 = vmatpush1.bf16.msra.mxu0 0
    %53 = vmatprep.subr.bf16.mxu0 0
    %54 = vmatpush1.bf16.msra.mxu0 0
    %55 = vmatprep.subr.bf16.mxu0 0
    %56 = vmatpush1.bf16.msra.mxu0 0
    %57 = vmatprep.subr.bf16.mxu0 0
    %58 = vmatpush1.bf16.msra.mxu0 0
    %59 = vmatprep.subr.bf16.mxu0 0
    %60 = vmatpush1.bf16.msra.mxu0 0
    %61 = vmatprep.subr.bf16.mxu0 0
    %62 = vmatpush1.bf16.msra.mxu0 0
    %63 = vmatprep.subr.bf16.mxu0 0
    %64 = vmatpush1.bf16.msra.mxu0 %v43
    %65 = vmatprep.subr.bf16.mxu0 0
    %66 = vmatpush2.bf16.msra.mxu0 0
    %67 = vmatprep.subr.bf16.mxu0 0
    %68 = vmatpush2.bf16.msra.mxu0 0
    %69 = vmatprep.subr.bf16.mxu0 0
    %70 = vmatpush2.bf16.msra.mxu0 0
    %71 = vmatprep.subr.bf16.mxu0 0
    %72 = vmatpush2.bf16.msra.mxu0 0
    %73 = vmatprep.subr.bf16.mxu0 0
    %74 = vmatpush2.bf16.msra.mxu0 0
    %75 = vmatprep.subr.bf16.mxu0 0
    %76 = vmatpush2.bf16.msra.mxu0 0
    %77 = vmatprep.subr.bf16.mxu0 0
    %78 = vmatpush2.bf16.msra.mxu0 0
    %79 = vmatprep.subr.bf16.mxu0 0
    %80 = vmatpush2.bf16.msra.mxu0 0
    %81 = vmatprep.mubr.bf16.mxu0 0
    %82 = vmatmul.mubr.bf16.gmra.mxu0 %v47
    %v83 = vpop.f32.mrf.mxu0
    %v84 = vadd.f32 %v37, %v83
    %v85 = vpop.f32.mrf.mxu0
    %v86 = vpop.f32.mrf.mxu0
    %v87 = vpop.f32.mrf.mxu0
    %88 = vdwg.mxu0
    %vm89 = vcmp.ge.f32.partialorder %v84, 0.0
    %v90 = vmul.f32 %v84, 0.01
    %v91 = vsel %vm89, %v84, %v90
    %v92 = vld [vmem:[#allocation2] sm:$0xff]
    %v93 = vpack.c.bf16 %v91, %v91
    %v94 = vld [vmem:[%s3] sm:$0xf]
    %v95 = vld [vmem:[%s3 + $0x4] sm:$0xf]
    %v96 = vld [vmem:[%s3 + $0x8] sm:$0xf]
    %v97 = vld [vmem:[%s3 + $0xc] sm:$0xf]
    %v102 = vunpack.c.l.b16 %v94
    %v103 = vunpack.c.l.b16 %v95
    %v104 = vunpack.c.l.b16 %v96
    %v105 = vunpack.c.l.b16 %v97
    %v106 = vpack.c.b16 %v103, %v102
    %v107 = vpack.c.b16 %v105, %v104
    %vm110 = vcmask 261120
    %v112 = vsel %vm110, %v93, 0
    %114 = vmatprep.subr.bf16.mxu0 0
    %115 = vmatpush1.bf16.msra.mxu0 0
    %116 = vmatprep.subr.bf16.mxu0 0
    %117 = vmatpush1.bf16.msra.mxu0 0
    %118 = vmatprep.subr.bf16.mxu0 0
    %119 = vmatpush1.bf16.msra.mxu0 0
    %120 = vmatprep.subr.bf16.mxu0 0
    %121 = vmatpush1.bf16.msra.mxu0 0
    %122 = vmatprep.subr.bf16.mxu0 0
    %123 = vmatpush1.bf16.msra.mxu0 0
    %124 = vmatprep.subr.bf16.mxu0 0
    %125 = vmatpush1.bf16.msra.mxu0 0
    %126 = vmatprep.subr.bf16.mxu0 0
    %127 = vmatpush1.bf16.msra.mxu0 %v107
    %128 = vmatprep.subr.bf16.mxu0 0
    %129 = vmatpush1.bf16.msra.mxu0 %v106
    %130 = vmatprep.subr.bf16.mxu0 0
    %131 = vmatpush2.bf16.msra.mxu0 0
    %132 = vmatprep.subr.bf16.mxu0 0
    %133 = vmatpush2.bf16.msra.mxu0 0
    %134 = vmatprep.subr.bf16.mxu0 0
    %135 = vmatpush2.bf16.msra.mxu0 0
    %136 = vmatprep.subr.bf16.mxu0 0
    %137 = vmatpush2.bf16.msra.mxu0 0
    %138 = vmatprep.subr.bf16.mxu0 0
    %139 = vmatpush2.bf16.msra.mxu0 0
    %140 = vmatprep.subr.bf16.mxu0 0
    %141 = vmatpush2.bf16.msra.mxu0 0
    %142 = vmatprep.subr.bf16.mxu0 0
    %143 = vmatpush2.bf16.msra.mxu0 0
    %144 = vmatprep.subr.bf16.mxu0 0
    %145 = vmatpush2.bf16.msra.mxu0 0
    %146 = vmatprep.mubr.bf16.mxu0 0
    %147 = vmatmul.mubr.bf16.gmra.mxu0 %v112
    %v148 = vpop.f32.mrf.mxu0
    %v149 = vadd.f32 0.0, %v148
    %v150 = vpop.f32.mrf.mxu0
    %v151 = vpop.f32.mrf.mxu0
    %v152 = vpop.f32.mrf.mxu0
    %153 = vdwg.mxu0
    %v154 = vadd.f32 %v92, %v149
    %155 = vst.msk [vmem:[#allocation2] sm:$0xff] %vm45, %v154
    // Predicated region
    $region26: #{tpu_custom_call.1} parent=1 // pred_check
      %p156 = pneg %p22
    $region27: #{tpu_custom_call.1} parent=1 // pred_check_branch
      %158 = sbr.rel (%p156) target = $region29
    $region28: #{tpu_custom_call.1} parent=1 // pred_region
      %v159 = vld [vmem:[#allocation2] sm:$0xff]
      %v160 = vld [vmem:[%s4] sm:$0x1]
      %v162 = vlaneseq
      %v163 = vshrl.u32 %v162, 7
      %v164 = vsub.s32 0, %v163
      %v165 = vrot.slane %v160, %v164
      %v167 = vadd.f32 %v159, %v165
      %v168 = vmul.f32 %v167, %v28
      %169 = vst.msk [vmem:[#allocation3] sm:$0xff] %vm45, %v168
    $region29: #{tpu_custom_call.1} parent=1 // pred_fallthru
      _
    // Predicated region
    $region30: #{tpu_custom_call.1} parent=1 // pred_check
      _
    $region31: #{tpu_custom_call.1} parent=1 // pred_check_branch
      %171 = sbr.rel (0) target = $region33
    $region32: #{tpu_custom_call.1} parent=1 // pred_region
      %s173 = ssub.s32 128, 128
      %174 = vsyncadd [#allocation4], %s173
      %s176 = sshll.u32 [#allocation3], 4
      %s177 = int_to_ptr.vmem [resolvable:$true] %s176
      %179 = dma.vmem_to_hbm [thread:$0]  %s177, 128, %s5, [#allocation4]
    $region33: #{tpu_custom_call.1} parent=1 // pred_fallthru
      _
    // Predicated region
    $region34: #{tpu_custom_call.1} parent=1 // pred_check
      _
    $region35: #{tpu_custom_call.1} parent=1 // pred_check_branch
      %181 = sbr.rel (0) target = $region37
    $region36: #{tpu_custom_call.1} parent=1 // pred_region
      %182 = dma.done [#allocation4], 128
    $region37: #{tpu_custom_call.1} parent=1 // pred_fallthru
      _
    %183 = vsyncpa [#allocation4], 1

</llo_original>
